<compile_context>
chip_gen: v7x
topology: tpu7x:2x2x1
jax: 0.10.0
libtpu: 0.0.40
codegen_flags: <defaults>
</compile_context>

<pallas_src>
import jax
import jax.numpy as jnp
import numpy as np
from jax.experimental import pallas as pl
from jax.experimental.pallas import tpu as pltpu

_LANES = 128
_ROW_MULT = 32          # sublane granularity safe for f32 / bf16 / int8 packing
_MiB = 1 << 20


def _round_up(n: int, m: int) -> int:
    return -(-n // m) * m


def _select_copy_params():
    """(target_block_bytes, vmem_limit_bytes) chosen from the TPU generation."""
    try:
        vmem_phys = int(pltpu.get_tpu_info().vmem_capacity_bytes)
    except Exception:
        # Unknown chip / interpret mode: conservative 2 MiB blocks, default
        # scoped-VMEM limit.
        return 2 * _MiB, None
    # 8 MiB blocks amortize the ~0.35 us per-grid-step overhead to <2% even at
    # v7x's 3.2 TB/s HBM.  in+out double-buffered = 4x block = 32 MiB, so raise
    # the scoped-VMEM limit to 40 MiB -- still well under the 64 MiB (v7x
    # per-TC) and 128 MiB (v5e/v6e) physical VMEM capacities.
    block = 8 * _MiB
    if vmem_phys < 64 * _MiB:              # defensive for unexpected small parts
        block = max(2 * _MiB, vmem_phys // 8)
    vmem_limit = min(vmem_phys, 5 * block)
    return block, vmem_limit


def _copy_kernel(x_ref, o_ref):
    # Pure data movement: HBM -> VMEM (auto-DMA via BlockSpec) -> HBM.
    o_ref[...] = x_ref[...]


def _pallas_copy_2d(x2d, target_block_bytes, vmem_limit_bytes, donate=False):
    """Identity copy of a lane-dense 2D view through a Pallas kernel."""
    R, C = x2d.shape
    itemsize = jnp.dtype(x2d.dtype).itemsize

    if R == 1:
        # Column-tiled path (non-128-divisible totals).  A (1, N) tile may be
        # padded to 8 sublanes in VMEM, so derate the block bytes 8x to stay
        # safely inside the scoped-VMEM budget; ragged tail is masked.
        col_block_bytes = max(256 * 1024, target_block_bytes // 8)
        tile_cols = max(_LANES, col_block_bytes // itemsize)
        tile_cols = (tile_cols // _LANES) * _LANES
        if C <= _LANES:
            tile_cols = C                      # full extent: always legal
        else:
            tile_cols = min(tile_cols, _round_up(C, _LANES))
            if C > 2 * _LANES:
                # Keep >= 2 grid steps so "parallel" can use both v7x cores.
                tile_cols = min(tile_cols, _round_up(pl.cdiv(C, 2), _LANES))
        grid = (pl.cdiv(C, tile_cols),)
        block_shape = (1, tile_cols)
        index_map = lambda i: (0, i)
    else:
        bytes_per_row = C * itemsize
        if R <= _ROW_MULT:
            tile_rows = R                      # full extent: always legal
        else:
            tile_rows = max(_ROW_MULT, target_block_bytes // bytes_per_row)
            tile_rows = (tile_rows // _ROW_MULT) * _ROW_MULT
            # Megacore: keep >= 2 grid steps whenever the array allows it.
            tile_rows = min(tile_rows,
                            max(_ROW_MULT, _round_up(pl.cdiv(R, 2), _ROW_MULT)))
        grid = (pl.cdiv(R, tile_rows),)
        block_shape = (tile_rows, C)
        index_map = lambda i: (i, 0)

    cp_kwargs = dict(dimension_semantics=("parallel",))
    if vmem_limit_bytes is not None:
        cp_kwargs["vmem_limit_bytes"] = int(vmem_limit_bytes)

    return pl.pallas_call(
        _copy_kernel,
        out_shape=jax.ShapeDtypeStruct((R, C), x2d.dtype),
        grid=grid,
        in_specs=[pl.BlockSpec(block_shape, index_map)],
        out_specs=pl.BlockSpec(block_shape, index_map),
        compiler_params=pltpu.CompilerParams(**cp_kwargs),
        cost_estimate=pl.CostEstimate(
            flops=0, transcendentals=0,
            bytes_accessed=2 * R * C * itemsize),
        input_output_aliases={0: 0} if donate else {},
    )(x2d)


def _view_2d(total: int):
    """Lane-dense 2D factorization (R, C) of a flat length-`total` buffer."""
    if total % _LANES != 0:
        # Single row, tile the lane dim; the ragged tail is masked in-kernel
        # (no jnp.pad -> no extra full HBM read+write of the whole tensor).
        return 1, total
    # Widen the lane dim when it divides evenly: fewer grid steps and less row
    # bookkeeping while remaining unmasked-vst friendly.
    for c in (2048, 1024, 512, 256):
        if total % c == 0 and total // c >= 8:
            return total // c, c
    return total // _LANES, _LANES


class Reshape:
    """JAX/Pallas equivalent of the PyTorch Reshape module.

    The default forward is the metadata-only jnp.reshape (zero data movement,
    matching torch's x.reshape(-1, *shape) on contiguous inputs).  Set
    force_copy=True to materialize the output through the Pallas identity-copy
    kernel; donate_input=True additionally aliases the input buffer into the
    output (only safe if the caller no longer needs x afterwards).
    """

    def __init__(self, shape, force_copy: bool = False, donate_input: bool = False):
        self.shape = tuple(int(s) for s in shape)
        self.force_copy = force_copy
        self.donate_input = donate_input

    def __call__(self, x: jax.Array) -> jax.Array:
        total = int(np.prod(x.shape)) if x.ndim > 0 else 1
        tail = int(np.prod(self.shape)) if self.shape else 1
        assert total % tail == 0, "input size not divisible by target shape"
        out_shape = (total // tail,) + self.shape

        if not self.force_copy:
            # Contiguous row-major reshape is metadata-only: no kernel needed.
            return x.reshape(out_shape)

        target_block, vmem_limit = _select_copy_params()
        R, C = _view_2d(total)
        y = _pallas_copy_2d(x.reshape(R, C), target_block, vmem_limit,
                            donate=self.donate_input)
        # Metadata-only reshape of the copied flat buffer to (-1, *shape).
        return y.reshape(out_shape)


if __name__ == "__main__":
    key = jax.random.PRNGKey(0)
    # x is NCHW (2, 4, 16, 16); target shape = (8, 32) -> output (8, 8, 32).
    x = jax.random.normal(key, (2, 4, 16, 16), dtype=jnp.float32)

    # Force the Pallas copy path so the kernel actually runs.
    y = jax.block_until_ready(Reshape(shape=(8, 32), force_copy=True)(x))
    y_ref = x.reshape(-1, 8, 32)
    assert y.shape == (8, 8, 32), y.shape
    assert y.dtype == x.dtype
    np.testing.assert_array_equal(np.asarray(y), np.asarray(y_ref))

    # Non-128-divisible total exercises the column-tiled (masked-tail) path
    # that replaced the jnp.pad fallback.
    x2 = jax.random.normal(jax.random.PRNGKey(0), (300,), dtype=jnp.float32)
    y2 = jax.block_until_ready(Reshape(shape=(3,), force_copy=True)(x2))
    assert y2.shape == (100, 3), y2.shape
    np.testing.assert_array_equal(np.asarray(y2), np.asarray(x2.reshape(-1, 3)))

    # Fast (metadata-only) default path must agree too.
    y_fast = jax.block_until_ready(Reshape(shape=(8, 32))(x))
    np.testing.assert_array_equal(np.asarray(y_fast), np.asarray(y_ref))

    print("KERNEL_OK")
</pallas_src>

<mosaic_0001>
module attributes {stable_mosaic.version = 11 : i64} {
  func.func @_copy_kernel(%arg0: i32, %arg1: memref<8x256xf32, #tpu.memory_space<vmem>>, %arg2: memref<8x256xf32, #tpu.memory_space<vmem>>) attributes {dimension_semantics = [#tpu.dimension_semantics<parallel>], iteration_bounds = array<i64: 1>, scalar_prefetch = 0 : i64, scratch_operands = 0 : i64, tpu.core_type = #tpu.core_type<tc>, window_params = [{transform_indices = @transform_0, window_bounds = array<i64: 8, 256>}, {transform_indices = @transform_1, window_bounds = array<i64: 8, 256>}]} {
    %c0 = arith.constant 0 : index
    %c0_0 = arith.constant 0 : index
    %0 = vector.load %arg1[%c0, %c0_0] : memref<8x256xf32, #tpu.memory_space<vmem>>, vector<8x256xf32>
    %c0_1 = arith.constant 0 : index
    %c0_2 = arith.constant 0 : index
    %1 = vector.load %arg2[%c0_1, %c0_2] : memref<8x256xf32, #tpu.memory_space<vmem>>, vector<8x256xf32>
    tpu.vector_store %arg2[%c0_1, %c0_2], %0 {strides = array<i32>} : memref<8x256xf32, #tpu.memory_space<vmem>>, vector<8x256xf32>,
    return
  }
  func.func @transform_0(%arg0: i32) -> (i32, i32) {
    %c0_i32 = arith.constant 0 : i32
    %c0_i32_0 = arith.constant 0 : i32
    return %arg0, %c0_i32 : i32, i32
  }
  func.func @transform_1(%arg0: i32) -> (i32, i32) {
    %c0_i32 = arith.constant 0 : i32
    %c0_i32_0 = arith.constant 0 : i32
    return %arg0, %c0_i32 : i32, i32
  }
}

</mosaic_0001>

<llo_original>
// kernel: tpu_custom_call.1
$region0: #{tpu_custom_call.1}
  #allocation0 [shape = 'u32[]', space=smem, size = 0x4, offset = 0x4, fixed_abs, tag = 'smem constant byte address 0x4 - core index']
  #allocation1 [shape = 'u32[144,128]{1,0:T(1,128)}', space=vmem, size = 0x12000, scoped, tag = 'internal scratch']
  %s0 = inlined_call_operand.hbm [shape: f32[8,256], index: 0, kind: input, shape index: {}]
  %s1 = inlined_call_operand.hbm [shape: f32[8,256], index: 1, kind: output, shape index: {}]
  %s2 = sld [smem:[#allocation0]]
  $region18: #{tpu_custom_call.1} parent=0
    _
  %s4 = ssub.s32 1, %s2
  %s5 = scalar_select 0, %s4, %s2
  $region1: #{tpu_custom_call.1} parent=0
    #allocation2 [shape = 'u8[8192]{0}', space=vmem, size = 0x2000, scoped, tag = 'input window, operand 0, single buffered']
    #allocation3 [shape = 's32[1]{0}', space=sflag, size = 0x4, scoped, tag = 'scoped memory for tpu_custom_call.1']
    #allocation4 [shape = 's32[1]{0}', space=sflag, size = 0x4, scoped, tag = 'scoped memory for tpu_custom_call.1']
    #allocation5 [shape = 'u8[8192]{0}', space=vmem, size = 0x2000, scoped, tag = 'output window, operand 0, single buffered']
    %6 = vsyncpa [#allocation3], 0
    %7 = vsyncpa [#allocation4], 0
    // Predicated region
    $region2: #{tpu_custom_call.1} parent=1 // pred_check
      _
    $region3: #{tpu_custom_call.1} parent=1 // pred_check_branch
      %9 = sbr.rel (0) target = $region5
    $region4: #{tpu_custom_call.1} parent=1 // pred_region
      %s11 = ssub.s32 256, 256
      %12 = vsyncadd [#allocation3], %s11
      %s14 = sshll.u32 [#allocation2], 4
      %s15 = int_to_ptr.vmem [resolvable:$true] %s14
      %17 = dma.hbm_to_vmem [thread:$0]  %s0, 256, %s15, [#allocation3]
    $region5: #{tpu_custom_call.1} parent=1 // pred_fallthru
      _
    // Predicated region
    $region6: #{tpu_custom_call.1} parent=1 // pred_check
      _
    $region7: #{tpu_custom_call.1} parent=1 // pred_check_branch
      %19 = sbr.rel (0) target = $region9
    $region8: #{tpu_custom_call.1} parent=1 // pred_region
      %20 = dma.done [#allocation3], 256
    $region9: #{tpu_custom_call.1} parent=1 // pred_fallthru
      _
    %v21 = vld [vmem:[#allocation2] sm:$0xff]
    %v22 = vld [vmem:[#allocation2 + $0x8] sm:$0xff]
    %23 = vst [vmem:[#allocation5] sm:$0xff] %v21
    %24 = vst [vmem:[#allocation5 + $0x8] sm:$0xff] %v22
    // Predicated region
    $region10: #{tpu_custom_call.1} parent=1 // pred_check
      _
    $region11: #{tpu_custom_call.1} parent=1 // pred_check_branch
      %26 = sbr.rel (0) target = $region13
    $region12: #{tpu_custom_call.1} parent=1 // pred_region
      %s28 = ssub.s32 256, 256
      %29 = vsyncadd [#allocation4], %s28
      %s31 = sshll.u32 [#allocation5], 4
      %s32 = int_to_ptr.vmem [resolvable:$true] %s31
      %34 = dma.vmem_to_hbm [thread:$0]  %s32, 256, %s1, [#allocation4]
    $region13: #{tpu_custom_call.1} parent=1 // pred_fallthru
      _
    // Predicated region
    $region14: #{tpu_custom_call.1} parent=1 // pred_check
      _
    $region15: #{tpu_custom_call.1} parent=1 // pred_check_branch
      %36 = sbr.rel (0) target = $region17
    $region16: #{tpu_custom_call.1} parent=1 // pred_region
      %37 = dma.done [#allocation4], 256
    $region17: #{tpu_custom_call.1} parent=1 // pred_fallthru
      _
    %38 = vsyncpa [#allocation3], 1
    %39 = vsyncpa [#allocation4], 1

</llo_original>
